<compile_context>
chip_gen: v6e
topology: v6e:2x2x1
jax: 0.10.0
libtpu: 0.0.40
codegen_flags: <defaults>
</compile_context>

<pallas_src>
import functools

import jax
import jax.numpy as jnp
from jax.experimental import pallas as pl
from jax.experimental.pallas import tpu as pltpu


def _round_up(x: int, m: int) -> int:
    return ((x + m - 1) // m) * m


def _cdiv(a: int, b: int) -> int:
    return (a + b - 1) // b


def _vmem_capacity_bytes() -> int:
    """Physical VMEM capacity; conservative (v7x) fallback if unavailable."""
    try:
        info = pltpu.get_tpu_info()
        cap = getattr(info, "vmem_capacity_bytes", None)
        if cap:
            return int(cap)
    except Exception:
        pass
    return 64 * 1024 * 1024  # v7x has the smallest VMEM of supported gens


def _l2norm_kernel(x_ref, o_ref, *, eps):
    # Reduce in f32 regardless of the input dtype.
    xf = x_ref[...].astype(jnp.float32)
    sq_sum = jnp.sum(xf * xf, axis=-1, keepdims=True)
    norm = jnp.sqrt(sq_sum) + eps            # eps added AFTER sqrt (module spec)
    inv = pl.reciprocal(norm, approx=False)  # exact; kernel is DMA-bound anyway
    # Re-read the original-dtype tile for the broadcasted multiply so the full
    # f32 copy of the tile does not have to stay live across the reduction.
    o_ref[...] = (x_ref[...].astype(jnp.float32) * inv).astype(o_ref.dtype)


def _pick_block_n(n: int, d_padded: int, itemsize: int, vmem_cap: int) -> int:
    """Pick a sublane-aligned row tile sized from the VMEM capacity."""
    # Sublane packing: 8 rows for 4-byte, 16 for 2-byte, 32 for 1-byte dtypes.
    pack = max(8, 32 // max(itemsize, 1))
    n_padded = _round_up(max(n, 1), pack)

    # Budget for double-buffered input + output tiles (4 * D * itemsize / row)
    # plus one f32 working slab per row (the squared values feeding the
    # reduction).  ~20 MiB on 128 MiB parts, ~16 MiB on v7x's 64 MiB.
    budget_bytes = min(20 * 1024 * 1024, vmem_cap // 4)
    bytes_per_row = 4 * d_padded * itemsize + 4 * d_padded
    block_n = max(pack, (budget_bytes // max(bytes_per_row, 1)) // pack * pack)
    block_n = min(block_n, n_padded)

    # Split into >= 2 blocks only when each block would still carry >= 512 KiB
    # of input data: single-TC v5e/v6e grids are serial loops (splitting small
    # inputs is pure overhead), while large inputs give v7x's two TensorCores
    # balanced work via dimension_semantics=("parallel",).
    if block_n >= n_padded and n_padded >= 2 * pack:
        half = _round_up(_cdiv(n_padded, 2), pack)
        if half * d_padded * itemsize >= 512 * 1024:
            block_n = min(block_n, half)

    # Re-balance: keep the same number of grid steps but equalize block sizes
    # so there is no tiny tail block (never increases the step count).
    num_blocks = _cdiv(n_padded, block_n)
    block_n = _round_up(_cdiv(n_padded, num_blocks), pack)
    return block_n


def l2norm(x: jax.Array, eps: float = 1e-10, block_n: int | None = None) -> jax.Array:
    """L2-normalize rows of an (N, D) array using a Pallas TPU kernel."""
    assert x.ndim == 2, "L2Norm expects an (N, D) input"
    N, D = x.shape
    itemsize = jnp.dtype(x.dtype).itemsize
    vmem_cap = _vmem_capacity_bytes()

    # Lane-dense stores: pad D up to a multiple of 128.  Zero padding does not
    # change the row sum of squares, so the normalization is unaffected.
    D_pad = _round_up(D, 128)
    x_in = x if D_pad == D else jnp.pad(x, ((0, 0), (0, D_pad - D)))

    if block_n is None:
        block_n = _pick_block_n(N, D_pad, itemsize, vmem_cap)

    grid_n = _cdiv(N, block_n)
    kernel = functools.partial(_l2norm_kernel, eps=eps)

    cost = pl.CostEstimate(
        flops=3 * N * D_pad,                               # square, reduce-add, scale
        transcendentals=2 * N,                             # sqrt + reciprocal per row
        bytes_accessed=2 * N * D_pad * itemsize + 4 * N,   # stream in + out (+ norms)
    )

    out = pl.pallas_call(
        kernel,
        out_shape=jax.ShapeDtypeStruct((N, D_pad), x.dtype),
        grid=(grid_n,),
        in_specs=[pl.BlockSpec((block_n, D_pad), lambda i: (i, 0))],
        out_specs=pl.BlockSpec((block_n, D_pad), lambda i: (i, 0)),
        compiler_params=pltpu.CompilerParams(
            dimension_semantics=("parallel",),
            vmem_limit_bytes=min(48 * 1024 * 1024, (vmem_cap * 3) // 4),
        ),
        cost_estimate=cost,
    )(x_in)

    return out if D_pad == D else out[:, :D]


def l2norm_ref(x: jax.Array, eps: float = 1e-10) -> jax.Array:
    xf = x.astype(jnp.float32)
    norm = jnp.sqrt(jnp.sum(xf * xf, axis=1, keepdims=True)) + eps
    return (xf / norm).astype(x.dtype)


if __name__ == "__main__":
    key = jax.random.PRNGKey(0)

    # Small (batch, embedding_dim) consistent with the module's (N, D) contract.
    N, D = 16, 256
    x = jax.random.normal(key, (N, D), dtype=jnp.float32)
    out = jax.block_until_ready(l2norm(x))
    ref = l2norm_ref(x)
    assert out.shape == x.shape and out.dtype == x.dtype
    assert jnp.allclose(out, ref, atol=1e-6, rtol=1e-5), "mismatch vs reference"

    # Remainder-safe path: N not a multiple of the row tile (masked last block).
    x2 = jax.random.normal(jax.random.PRNGKey(0), (12, D), dtype=jnp.float32)
    out2 = jax.block_until_ready(l2norm(x2))
    assert jnp.allclose(out2, l2norm_ref(x2), atol=1e-6, rtol=1e-5), \
        "mismatch vs reference (partial block)"

    # Lane-padding path: D not a multiple of 128 (zero-pad + slice in wrapper).
    x3 = jax.random.normal(jax.random.PRNGKey(0), (8, 100), dtype=jnp.float32)
    out3 = jax.block_until_ready(l2norm(x3))
    assert out3.shape == x3.shape
    assert jnp.allclose(out3, l2norm_ref(x3), atol=1e-6, rtol=1e-5), \
        "mismatch vs reference (padded D)"

    # Sub-32-bit path (bf16): exercises the re-read-the-narrow-tile multiply.
    x4 = jax.random.normal(jax.random.PRNGKey(0), (16, 256), dtype=jnp.bfloat16)
    out4 = jax.block_until_ready(l2norm(x4))
    assert jnp.allclose(out4.astype(jnp.float32),
                        l2norm_ref(x4).astype(jnp.float32),
                        atol=1e-2, rtol=1e-2), "mismatch vs reference (bf16)"

    print("KERNEL_OK")
</pallas_src>

<mosaic_0001>
module attributes {stable_mosaic.version = 11 : i64} {
  func.func @_l2norm_kernel(%arg0: i32, %arg1: memref<16x256xf32, #tpu.memory_space<vmem>>, %arg2: memref<16x256xf32, #tpu.memory_space<vmem>>) attributes {dimension_semantics = [#tpu.dimension_semantics<parallel>], iteration_bounds = array<i64: 1>, scalar_prefetch = 0 : i64, scratch_operands = 0 : i64, tpu.core_type = #tpu.core_type<tc>, window_params = [{transform_indices = @transform_0, window_bounds = array<i64: 16, 256>}, {transform_indices = @transform_1, window_bounds = array<i64: 16, 256>}]} {
    %c0 = arith.constant 0 : index
    %c0_0 = arith.constant 0 : index
    %0 = vector.load %arg1[%c0, %c0_0] : memref<16x256xf32, #tpu.memory_space<vmem>>, vector<16x256xf32>
    %1 = arith.mulf %0, %0 : vector<16x256xf32>
    %cst = arith.constant dense<0.000000e+00> : vector<16xf32>
    %2 = vector.multi_reduction <add>, %1, %cst [1] : vector<16x256xf32> to vector<16xf32>
    %3 = vector.shape_cast %2 : vector<16xf32> to vector<16x1xf32>
    %4 = math.sqrt %3 : vector<16x1xf32>
    %cst_1 = arith.constant 1.000000e-10 : f32
    %5 = vector.broadcast %cst_1 : f32 to vector<16x1xf32>
    %6 = arith.addf %4, %5 : vector<16x1xf32>
    %7 = tpu.reciprocal %6 : vector<16x1xf32> -> vector<16x1xf32>
    %c0_2 = arith.constant 0 : index
    %c0_3 = arith.constant 0 : index
    %8 = vector.load %arg1[%c0_2, %c0_3] : memref<16x256xf32, #tpu.memory_space<vmem>>, vector<16x256xf32>
    %9 = vector.broadcast %7 : vector<16x1xf32> to vector<16x256xf32>
    %10 = arith.mulf %8, %9 : vector<16x256xf32>
    %c0_4 = arith.constant 0 : index
    %c0_5 = arith.constant 0 : index
    %11 = vector.load %arg2[%c0_4, %c0_5] : memref<16x256xf32, #tpu.memory_space<vmem>>, vector<16x256xf32>
    tpu.vector_store %arg2[%c0_4, %c0_5], %10 {strides = array<i32>} : memref<16x256xf32, #tpu.memory_space<vmem>>, vector<16x256xf32>,
    return
  }
  func.func @transform_0(%arg0: i32) -> (i32, i32) {
    %c0_i32 = arith.constant 0 : i32
    %c0_i32_0 = arith.constant 0 : i32
    return %arg0, %c0_i32 : i32, i32
  }
  func.func @transform_1(%arg0: i32) -> (i32, i32) {
    %c0_i32 = arith.constant 0 : i32
    %c0_i32_0 = arith.constant 0 : i32
    return %arg0, %c0_i32 : i32, i32
  }
}

</mosaic_0001>

<llo_original>
// kernel: tpu_custom_call.1
$region0: #{tpu_custom_call.1}
  #allocation0 [shape = 'u32[]', space=smem, size = 0x4, offset = 0x4, fixed_abs, tag = 'smem constant byte address 0x4 - core index']
  #allocation1 [shape = 'u32[144,128]{1,0:T(1,128)}', space=vmem, size = 0x12000, scoped, tag = 'internal scratch']
  %s0 = inlined_call_operand.hbm [shape: f32[16,256], index: 0, kind: input, shape index: {}]
  %s1 = inlined_call_operand.hbm [shape: f32[16,256], index: 1, kind: output, shape index: {}]
  %s2 = sld [smem:[#allocation0]]
  $region18: #{tpu_custom_call.1} parent=0
    _
  %s4 = ssub.s32 1, %s2
  %s5 = scalar_select 0, %s4, %s2
  $region1: #{tpu_custom_call.1} parent=0
    #allocation2 [shape = 'u8[16384]{0}', space=vmem, size = 0x4000, scoped, tag = 'input window, operand 0, single buffered']
    #allocation3 [shape = 's32[1]{0}', space=sflag, size = 0x4, scoped, tag = 'scoped memory for tpu_custom_call.1']
    #allocation4 [shape = 's32[1]{0}', space=sflag, size = 0x4, scoped, tag = 'scoped memory for tpu_custom_call.1']
    #allocation5 [shape = 'u8[16384]{0}', space=vmem, size = 0x4000, scoped, tag = 'output window, operand 0, single buffered']
    %6 = vsyncpa [#allocation3], 0
    %7 = vsyncpa [#allocation4], 0
    // Predicated region
    $region2: #{tpu_custom_call.1} parent=1 // pred_check
      _
    $region3: #{tpu_custom_call.1} parent=1 // pred_check_branch
      %9 = sbr.rel (0) target = $region5
    $region4: #{tpu_custom_call.1} parent=1 // pred_region
      %s11 = ssub.s32 512, 512
      %12 = vsyncadd [#allocation3], %s11
      %s13 = sshll.u32 [#allocation2], 4
      %s14 = int_to_ptr.vmem [resolvable:$true] %s13
      %19 = dma.hbm_to_vmem [thread:$0]  %s0, 512, %s14, [#allocation3], 256, 256, 16
    $region5: #{tpu_custom_call.1} parent=1 // pred_fallthru
      _
    // Predicated region
    $region6: #{tpu_custom_call.1} parent=1 // pred_check
      _
    $region7: #{tpu_custom_call.1} parent=1 // pred_check_branch
      %21 = sbr.rel (0) target = $region9
    $region8: #{tpu_custom_call.1} parent=1 // pred_region
      %22 = dma.done [#allocation3], 512
    $region9: #{tpu_custom_call.1} parent=1 // pred_fallthru
      _
    %v23 = vld [vmem:[#allocation2] sm:$0xff]
    %v24 = vld [vmem:[#allocation2 + $0x8] sm:$0xff]
    %v25 = vld [vmem:[#allocation2 + $0x10] sm:$0xff]
    %v26 = vld [vmem:[#allocation2 + $0x18] sm:$0xff]
    %v27 = vmul.f32 %v23, %v23
    %v28 = vmul.f32 %v24, %v24
    %v29 = vmul.f32 %v25, %v25
    %v30 = vmul.f32 %v26, %v26
    %v31 = vadd.f32 %v27, %v28
    %32 = vadd.xlane.f32.xlu0 %v31
    %v33 = vpop.xlane.xlu0 %32
    %v34 = vadd.f32 %v29, %v30
    %35 = vadd.xlane.f32.xlu0 %v34
    %v36 = vpop.xlane.xlu0 %35
    %v37 = vrsqrt.pop %v33
    %v38 = vmul.f32 %v33, %v37
    %vm39 = vcmp.eq.f32.partialorder %v33, inf
    %v40 = vsel %vm39, %v33, %v38
    %vm41 = vcmp.eq.f32.partialorder %v33, 0.0
    %v42 = vand.u32 %v33, 2147483648
    %v43 = vsel %vm41, %v42, %v40
    %v44 = vrsqrt.pop %v36
    %v45 = vmul.f32 %v36, %v44
    %vm46 = vcmp.eq.f32.partialorder %v36, inf
    %v47 = vsel %vm46, %v36, %v45
    %vm48 = vcmp.eq.f32.partialorder %v36, 0.0
    %v49 = vand.u32 %v36, 2147483648
    %v50 = vsel %vm48, %v49, %v47
    %v51 = vadd.f32 %v43, 1e-10
    %v52 = vadd.f32 %v50, 1e-10
    %v53 = vrcp.pop %v51
    %v54 = vrcp.pop %v52
    %v55 = vmul.f32 %v23, %v53
    %v56 = vmul.f32 %v24, %v53
    %v57 = vmul.f32 %v25, %v54
    %v58 = vmul.f32 %v26, %v54
    %59 = vst [vmem:[#allocation5] sm:$0xff] %v55
    %60 = vst [vmem:[#allocation5 + $0x8] sm:$0xff] %v56
    %61 = vst [vmem:[#allocation5 + $0x10] sm:$0xff] %v57
    %62 = vst [vmem:[#allocation5 + $0x18] sm:$0xff] %v58
    // Predicated region
    $region10: #{tpu_custom_call.1} parent=1 // pred_check
      _
    $region11: #{tpu_custom_call.1} parent=1 // pred_check_branch
      %64 = sbr.rel (0) target = $region13
    $region12: #{tpu_custom_call.1} parent=1 // pred_region
      %s66 = ssub.s32 512, 512
      %67 = vsyncadd [#allocation4], %s66
      %s68 = sshll.u32 [#allocation5], 4
      %s69 = int_to_ptr.vmem [resolvable:$true] %s68
      %74 = dma.vmem_to_hbm [thread:$0]  %s69, 512, %s1, [#allocation4], 256, 256, 16
    $region13: #{tpu_custom_call.1} parent=1 // pred_fallthru
      _
    // Predicated region
    $region14: #{tpu_custom_call.1} parent=1 // pred_check
      _
    $region15: #{tpu_custom_call.1} parent=1 // pred_check_branch
      %76 = sbr.rel (0) target = $region17
    $region16: #{tpu_custom_call.1} parent=1 // pred_region
      %77 = dma.done [#allocation4], 512
    $region17: #{tpu_custom_call.1} parent=1 // pred_fallthru
      _
    %78 = vsyncpa [#allocation3], 1
    %79 = vsyncpa [#allocation4], 1

</llo_original>
